<compile_context>
chip_gen: v6e
topology: v6e:2x2x1
jax: 0.10.0
libtpu: 0.0.40
codegen_flags: <defaults>
</compile_context>

<pallas_src>
import math
from functools import partial

import jax
import jax.numpy as jnp
from jax.experimental import pallas as pl
from jax.experimental.pallas import tpu as pltpu


def _mlp_kernel(x_ref, w1_ref, b1_ref, w2_ref, b2_ref, w3_ref, b3_ref, o_ref):
    # x arrives fp32 straight from HBM; cast to bf16 in-kernel right before the
    # first MXU op (VPU work hidden under DMA/MXU slack).
    xb = x_ref[...].astype(jnp.bfloat16)

    # Layer 1: (TB, F) bf16 @ (F, H) bf16 -> fp32 MXU accumulate, + bias, ReLU.
    h1 = jnp.dot(xb, w1_ref[...], preferred_element_type=jnp.float32)
    h1 = jnp.maximum(h1 + b1_ref[...], 0.0)        # Dropout = identity (eval)

    # Layer 2: (TB, H) bf16 @ (H, H2) bf16 -> fp32, + bias, ReLU.
    h2 = jnp.dot(h1.astype(jnp.bfloat16), w2_ref[...],
                 preferred_element_type=jnp.float32)
    h2 = jnp.maximum(h2 + b2_ref[...], 0.0)        # Dropout = identity (eval)

    # Layer 3 (H2 -> 1): VPU multiply + XLU lane reduce (no 1-lane MXU matmul),
    # written as a lane-dense (1, TB) row.
    row = jnp.sum(h2 * w3_ref[...], axis=-1)       # (TB,)
    o_ref[...] = jnp.reshape(row + b3_ref[0, 0], (1, -1))


def _round_up8(n):
    return ((n + 7) // 8) * 8


@partial(jax.jit, static_argnames=("block_b",))
def nn2net_forward(x, w1, b1, w2, b2, w3, b3, *, block_b=8192):
    """Fused NN2net forward. x:(B,F) fp32; weights stored as (in,out).

    Returns a (B, 1) float32 array (matches the PyTorch module output, modulo
    bf16 MXU-operand quantization — inference-grade accuracy, not bit-exact).
    """
    B, F = x.shape
    H = w1.shape[1]
    H2 = w2.shape[1]

    # Batch tile: multiple of 8 (sublane), capped at block_b, and also capped at
    # ~ceil(B/2) so the grid has >= 2 steps whenever B > 8 (keeps both v7x
    # TensorCores busy via dimension_semantics=("parallel",)).
    TB = min(block_b, max(8, _round_up8(pl.cdiv(B, 2))))
    num_tiles = pl.cdiv(B, TB)

    # MXU operands in bf16 (tiny, one-off param casts); everything else fp32.
    w1b = w1.astype(jnp.bfloat16)
    w2b = w2.astype(jnp.bfloat16)
    w3r = w3.reshape(1, H2).astype(jnp.float32)    # row vector for the VPU layer
    b3s = b3.reshape(1, 1).astype(jnp.float32)     # scalar -> SMEM

    def const2d(shape):
        # Constant block index across grid steps -> stays VMEM-resident.
        return pl.BlockSpec(shape, lambda i: (0, 0))

    param_bytes = (F * H + H * H2) * 2 + (H + H2 + H2 + 1) * 4
    cost = pl.CostEstimate(
        flops=2 * B * (F * H + H * H2 + H2),
        transcendentals=0,
        bytes_accessed=B * (F * 4 + 4) + param_bytes,
    )

    out = pl.pallas_call(
        _mlp_kernel,
        out_shape=jax.ShapeDtypeStruct((num_tiles, TB), jnp.float32),
        grid=(num_tiles,),
        in_specs=[
            pl.BlockSpec((TB, F), lambda i: (i, 0)),            # x: streamed fp32 tiles
            const2d((F, H)),                                    # W1 (resident)
            const2d((1, H)),                                    # b1
            const2d((H, H2)),                                   # W2
            const2d((1, H2)),                                   # b2
            const2d((1, H2)),                                   # W3 row
            pl.BlockSpec(memory_space=pltpu.MemorySpace.SMEM),  # b3 scalar
        ],
        out_specs=pl.BlockSpec((1, TB), lambda i: (i, 0)),      # lane-dense rows
        compiler_params=pltpu.CompilerParams(
            dimension_semantics=("parallel",),
        ),
        cost_estimate=cost,
    )(x, w1b, b1, w2b, b2, w3r, b3s)

    # Rows are independent; any undefined data read from the unpadded ragged
    # tail of the last input block only lands in output rows >= B, sliced here.
    return out.reshape(num_tiles * TB, 1)[:B]


def _ref_forward_f32(x, w1, b1, w2, b2, w3, b3):
    h1 = jnp.maximum(x @ w1 + b1, 0.0)
    h2 = jnp.maximum(h1 @ w2 + b2, 0.0)
    return h2 @ w3 + b3


def _ref_forward_bf16(x, w1, b1, w2, b2, w3, b3):
    # Same bf16-operand / fp32-accumulate recipe as the kernel.
    h1 = jnp.dot(x.astype(jnp.bfloat16), w1.astype(jnp.bfloat16),
                 preferred_element_type=jnp.float32)
    h1 = jnp.maximum(h1 + b1, 0.0)
    h2 = jnp.dot(h1.astype(jnp.bfloat16), w2.astype(jnp.bfloat16),
                 preferred_element_type=jnp.float32)
    h2 = jnp.maximum(h2 + b2, 0.0)
    return jnp.sum(h2 * w3.reshape(1, -1), axis=-1, keepdims=True) + b3.reshape(1, 1)


if __name__ == "__main__":
    # Module hyperparameters (small, consistent with NN2net.__init__):
    num_feature = 32
    hidden_size = 64
    hidden_2 = int(math.sqrt(hidden_size))   # matches spec's int(np.sqrt(H)) -> 8
    batch = 8

    key = jax.random.PRNGKey(0)
    kx, k1, kb1, k2, kb2, k3, kb3, kx2 = jax.random.split(key, 8)

    x = jax.random.normal(kx, (batch, num_feature), dtype=jnp.float32)

    # Deterministic parameter init (stored as (in, out), i.e. PyTorch W^T).
    w1 = jax.random.normal(k1, (num_feature, hidden_size), jnp.float32) * 0.1
    b1 = jax.random.normal(kb1, (1, hidden_size), jnp.float32) * 0.1
    w2 = jax.random.normal(k2, (hidden_size, hidden_2), jnp.float32) * 0.1
    b2 = jax.random.normal(kb2, (1, hidden_2), jnp.float32) * 0.1
    w3 = jax.random.normal(k3, (hidden_2, 1), jnp.float32) * 0.1
    b3 = jax.random.normal(kb3, (1, 1), jnp.float32) * 0.1

    # Small-batch check (single grid step).
    out = jax.block_until_ready(nn2net_forward(x, w1, b1, w2, b2, w3, b3))
    assert out.shape == (batch, 1), out.shape
    ref_bf16 = _ref_forward_bf16(x, w1, b1, w2, b2, w3, b3)
    ref_f32 = _ref_forward_f32(x, w1, b1, w2, b2, w3, b3)
    assert jnp.allclose(out, ref_bf16, atol=1e-4, rtol=1e-3), (out, ref_bf16)
    assert jnp.allclose(out, ref_f32, atol=5e-2, rtol=5e-2), (out, ref_f32)

    # Larger batch, default tiling: TB = ceil(1000/2) rounded to 8 = 504,
    # 2 grid steps (both v7x TCs), ragged last tile of 496 live rows.
    big_batch = 1000
    x_big = jax.random.normal(kx2, (big_batch, num_feature), dtype=jnp.float32)
    ref_big = _ref_forward_bf16(x_big, w1, b1, w2, b2, w3, b3)

    out_big = jax.block_until_ready(
        nn2net_forward(x_big, w1, b1, w2, b2, w3, b3))
    assert out_big.shape == (big_batch, 1), out_big.shape
    assert jnp.allclose(out_big, ref_big, atol=1e-4, rtol=1e-3), "big-batch mismatch"

    # Same batch with a small forced tile: 4 grid steps, ragged last tile
    # (1000 = 3*256 + 232) — exercises the unpadded tail path.
    out_big_small_tile = jax.block_until_ready(
        nn2net_forward(x_big, w1, b1, w2, b2, w3, b3, block_b=256))
    assert out_big_small_tile.shape == (big_batch, 1), out_big_small_tile.shape
    assert jnp.allclose(out_big_small_tile, ref_big, atol=1e-4, rtol=1e-3), \
        "small-tile mismatch"

    print("KERNEL_OK")
</pallas_src>

<mosaic_0001>
module attributes {stable_mosaic.version = 11 : i64} {
  func.func @_mlp_kernel(%arg0: i32, %arg1: memref<8x32xf32, #tpu.memory_space<vmem>>, %arg2: memref<32x64xbf16, #tpu.memory_space<vmem>>, %arg3: memref<1x64xf32, #tpu.memory_space<vmem>>, %arg4: memref<64x8xbf16, #tpu.memory_space<vmem>>, %arg5: memref<1x8xf32, #tpu.memory_space<vmem>>, %arg6: memref<1x8xf32, #tpu.memory_space<vmem>>, %arg7: memref<1x1xf32, #tpu.memory_space<smem>>, %arg8: memref<1x8xf32, #tpu.memory_space<vmem>>) attributes {dimension_semantics = [#tpu.dimension_semantics<parallel>], iteration_bounds = array<i64: 1>, scalar_prefetch = 0 : i64, scratch_operands = 0 : i64, tpu.core_type = #tpu.core_type<tc>, window_params = [{transform_indices = @transform_0, window_bounds = array<i64: 8, 32>}, {pipeline_mode = #tpu.pipeline_mode<synchronous>, transform_indices = @transform_1, window_bounds = array<i64: 32, 64>}, {pipeline_mode = #tpu.pipeline_mode<synchronous>, transform_indices = @transform_2, window_bounds = array<i64: 1, 64>}, {pipeline_mode = #tpu.pipeline_mode<synchronous>, transform_indices = @transform_3, window_bounds = array<i64: 64, 8>}, {pipeline_mode = #tpu.pipeline_mode<synchronous>, transform_indices = @transform_4, window_bounds = array<i64: 1, 8>}, {pipeline_mode = #tpu.pipeline_mode<synchronous>, transform_indices = @transform_5, window_bounds = array<i64: 1, 8>}, {transform_indices = @transform_6, window_bounds = array<i64: 1, 1>}, {transform_indices = @transform_7, window_bounds = array<i64: 1, 8>}]} {
    %c0 = arith.constant 0 : index
    %c0_0 = arith.constant 0 : index
    %0 = vector.load %arg1[%c0, %c0_0] : memref<8x32xf32, #tpu.memory_space<vmem>>, vector<8x32xf32>
    %1 = arith.truncf %0 : vector<8x32xf32> to vector<8x32xbf16>
    %c0_1 = arith.constant 0 : index
    %c0_2 = arith.constant 0 : index
    %2 = vector.load %arg2[%c0_1, %c0_2] : memref<32x64xbf16, #tpu.memory_space<vmem>>, vector<32x64xbf16>
    %cst = arith.constant dense<0.000000e+00> : vector<8x64xf32>
    %3 = tpu.matmul %1, %2, %cst {dimension_numbers = #tpu.dot_dimension_numbers<[1], [0], [0], [1], [0, 0, 1, 1], [], []>} : vector<8x32xbf16>, vector<32x64xbf16>, vector<8x64xf32> -> vector<8x64xf32>
    %c0_3 = arith.constant 0 : index
    %c0_4 = arith.constant 0 : index
    %4 = vector.load %arg3[%c0_3, %c0_4] : memref<1x64xf32, #tpu.memory_space<vmem>>, vector<1x64xf32>
    %5 = vector.broadcast %4 : vector<1x64xf32> to vector<8x64xf32>
    %6 = arith.addf %3, %5 : vector<8x64xf32>
    %cst_5 = arith.constant 0.000000e+00 : f32
    %7 = vector.broadcast %cst_5 : f32 to vector<8x64xf32>
    %8 = arith.maximumf %6, %7 : vector<8x64xf32>
    %9 = arith.truncf %8 : vector<8x64xf32> to vector<8x64xbf16>
    %c0_6 = arith.constant 0 : index
    %c0_7 = arith.constant 0 : index
    %10 = vector.load %arg4[%c0_6, %c0_7] : memref<64x8xbf16, #tpu.memory_space<vmem>>, vector<64x8xbf16>
    %cst_8 = arith.constant dense<0.000000e+00> : vector<8x8xf32>
    %11 = tpu.matmul %9, %10, %cst_8 {dimension_numbers = #tpu.dot_dimension_numbers<[1], [0], [0], [1], [0, 0, 1, 1], [], []>} : vector<8x64xbf16>, vector<64x8xbf16>, vector<8x8xf32> -> vector<8x8xf32>
    %c0_9 = arith.constant 0 : index
    %c0_10 = arith.constant 0 : index
    %12 = vector.load %arg5[%c0_9, %c0_10] : memref<1x8xf32, #tpu.memory_space<vmem>>, vector<1x8xf32>
    %13 = vector.broadcast %12 : vector<1x8xf32> to vector<8x8xf32>
    %14 = arith.addf %11, %13 : vector<8x8xf32>
    %cst_11 = arith.constant 0.000000e+00 : f32
    %15 = vector.broadcast %cst_11 : f32 to vector<8x8xf32>
    %16 = arith.maximumf %14, %15 : vector<8x8xf32>
    %c0_12 = arith.constant 0 : index
    %c0_13 = arith.constant 0 : index
    %17 = vector.load %arg6[%c0_12, %c0_13] : memref<1x8xf32, #tpu.memory_space<vmem>>, vector<1x8xf32>
    %18 = vector.broadcast %17 : vector<1x8xf32> to vector<8x8xf32>
    %19 = arith.mulf %16, %18 : vector<8x8xf32>
    %cst_14 = arith.constant dense<0.000000e+00> : vector<8xf32>
    %20 = vector.multi_reduction <add>, %19, %cst_14 [1] : vector<8x8xf32> to vector<8xf32>
    %c0_15 = arith.constant 0 : index
    %c0_16 = arith.constant 0 : index
    %21 = memref.load %arg7[%c0_15, %c0_16] : memref<1x1xf32, #tpu.memory_space<smem>>
    %22 = vector.broadcast %21 : f32 to vector<8xf32>
    %23 = arith.addf %20, %22 : vector<8xf32>
    %24 = vector.shape_cast %23 : vector<8xf32> to vector<1x8xf32>
    %c0_17 = arith.constant 0 : index
    %c0_18 = arith.constant 0 : index
    %25 = vector.load %arg8[%c0_17, %c0_18] : memref<1x8xf32, #tpu.memory_space<vmem>>, vector<1x8xf32>
    tpu.vector_store %arg8[%c0_17, %c0_18], %24 {strides = array<i32>} : memref<1x8xf32, #tpu.memory_space<vmem>>, vector<1x8xf32>,
    return
  }
  func.func @transform_0(%arg0: i32) -> (i32, i32) {
    %c0_i32 = arith.constant 0 : i32
    %c0_i32_0 = arith.constant 0 : i32
    return %arg0, %c0_i32 : i32, i32
  }
  func.func @transform_1(%arg0: i32) -> (i32, i32) {
    %c0_i32 = arith.constant 0 : i32
    %c0_i32_0 = arith.constant 0 : i32
    %c0_i32_1 = arith.constant 0 : i32
    return %c0_i32, %c0_i32_0 : i32, i32
  }
  func.func @transform_2(%arg0: i32) -> (i32, i32) {
    %c0_i32 = arith.constant 0 : i32
    %c0_i32_0 = arith.constant 0 : i32
    %c0_i32_1 = arith.constant 0 : i32
    return %c0_i32, %c0_i32_0 : i32, i32
  }
  func.func @transform_3(%arg0: i32) -> (i32, i32) {
    %c0_i32 = arith.constant 0 : i32
    %c0_i32_0 = arith.constant 0 : i32
    %c0_i32_1 = arith.constant 0 : i32
    return %c0_i32, %c0_i32_0 : i32, i32
  }
  func.func @transform_4(%arg0: i32) -> (i32, i32) {
    %c0_i32 = arith.constant 0 : i32
    %c0_i32_0 = arith.constant 0 : i32
    %c0_i32_1 = arith.constant 0 : i32
    return %c0_i32, %c0_i32_0 : i32, i32
  }
  func.func @transform_5(%arg0: i32) -> (i32, i32) {
    %c0_i32 = arith.constant 0 : i32
    %c0_i32_0 = arith.constant 0 : i32
    %c0_i32_1 = arith.constant 0 : i32
    return %c0_i32, %c0_i32_0 : i32, i32
  }
  func.func @transform_6(%arg0: i32) -> (i32, i32) {
    %c0_i32 = arith.constant 0 : i32
    %c0_i32_0 = arith.constant 0 : i32
    %c0_i32_1 = arith.constant 0 : i32
    return %c0_i32, %c0_i32_0 : i32, i32
  }
  func.func @transform_7(%arg0: i32) -> (i32, i32) {
    %c0_i32 = arith.constant 0 : i32
    %c0_i32_0 = arith.constant 0 : i32
    return %arg0, %c0_i32 : i32, i32
  }
}

</mosaic_0001>

<llo_original>
// kernel: nn2net_forward.1
$region0: #{nn2net_forward.1}
  #allocation0 [shape = 'u32[]', space=smem, size = 0x4, offset = 0x4, fixed_abs, tag = 'smem constant byte address 0x4 - core index']
  #allocation1 [shape = 'u32[144,128]{1,0:T(1,128)}', space=vmem, size = 0x12000, scoped, tag = 'internal scratch']
  #allocation2 [shape = 'f32[1,1]{1,0:T(1,128)S(6)}', space=smem, size = 0x200, scoped, tag = 'scoped memory for nn2net_forward.1']
  %s0 = inlined_call_operand.vmem [shape: f32[8,32], index: 0, kind: input, shape index: {}]
  %s1 = inlined_call_operand.vmem [shape: bf16[32,64], index: 1, kind: input, shape index: {}]
  %s2 = inlined_call_operand.vmem [shape: f32[1,64], index: 2, kind: input, shape index: {}]
  %s3 = inlined_call_operand.vmem [shape: bf16[64,8], index: 3, kind: input, shape index: {}]
  %s4 = inlined_call_operand.vmem [shape: f32[1,8], index: 4, kind: input, shape index: {}]
  %s5 = inlined_call_operand.vmem [shape: f32[1,8], index: 5, kind: input, shape index: {}]
  %s6 = inlined_call_operand.<no memory space> [shape: f32[1,1], index: 6, kind: input, shape index: {}]
  %s7 = inlined_call_operand.hbm [shape: f32[1,8], index: 7, kind: output, shape index: {}]
  %s8 = sld [smem:[#allocation0]]
  $region38: #{nn2net_forward.1} parent=0
    _
  %s10 = ssub.s32 1, %s8
  %s11 = scalar_select 0, %s10, %s8
  %12 = sst [smem:[#allocation2]] %s6
  $region1: #{nn2net_forward.1} parent=0
    #allocation3 [shape = 'u8[512]{0}', space=vmem, size = 0x400, scoped, tag = 'output window, operand 0, single buffered']
    #allocation4 [shape = 's32[1]{0}', space=sflag, size = 0x4, scoped, tag = 'scoped memory for nn2net_forward.1']
    %13 = vsyncpa [#allocation4], 0
    // Predicated region
    $region2: #{nn2net_forward.1} parent=1 // pred_check
      _
    $region3: #{nn2net_forward.1} parent=1 // pred_check_branch
      %15 = sbr.rel (0) target = $region5
    $region4: #{nn2net_forward.1} parent=1 // pred_region
      _
    $region5: #{nn2net_forward.1} parent=1 // pred_fallthru
      _
    // Predicated region
    $region6: #{nn2net_forward.1} parent=1 // pred_check
      _
    $region7: #{nn2net_forward.1} parent=1 // pred_check_branch
      %17 = sbr.rel (0) target = $region9
    $region8: #{nn2net_forward.1} parent=1 // pred_region
      _
    $region9: #{nn2net_forward.1} parent=1 // pred_fallthru
      _
    // Predicated region
    $region10: #{nn2net_forward.1} parent=1 // pred_check
      _
    $region11: #{nn2net_forward.1} parent=1 // pred_check_branch
      %19 = sbr.rel (0) target = $region13
    $region12: #{nn2net_forward.1} parent=1 // pred_region
      _
    $region13: #{nn2net_forward.1} parent=1 // pred_fallthru
      _
    // Predicated region
    $region14: #{nn2net_forward.1} parent=1 // pred_check
      _
    $region15: #{nn2net_forward.1} parent=1 // pred_check_branch
      %21 = sbr.rel (0) target = $region17
    $region16: #{nn2net_forward.1} parent=1 // pred_region
      _
    $region17: #{nn2net_forward.1} parent=1 // pred_fallthru
      _
    // Predicated region
    $region18: #{nn2net_forward.1} parent=1 // pred_check
      _
    $region19: #{nn2net_forward.1} parent=1 // pred_check_branch
      %23 = sbr.rel (0) target = $region21
    $region20: #{nn2net_forward.1} parent=1 // pred_region
      _
    $region21: #{nn2net_forward.1} parent=1 // pred_fallthru
      _
    // Predicated region
    $region22: #{nn2net_forward.1} parent=1 // pred_check
      _
    $region23: #{nn2net_forward.1} parent=1 // pred_check_branch
      %25 = sbr.rel (0) target = $region25
    $region24: #{nn2net_forward.1} parent=1 // pred_region
      _
    $region25: #{nn2net_forward.1} parent=1 // pred_fallthru
      _
    // Predicated region
    $region26: #{nn2net_forward.1} parent=1 // pred_check
      _
    $region27: #{nn2net_forward.1} parent=1 // pred_check_branch
      %27 = sbr.rel (0) target = $region29
    $region28: #{nn2net_forward.1} parent=1 // pred_region
      _
    $region29: #{nn2net_forward.1} parent=1 // pred_fallthru
      _
    %v29 = vld [vmem:[%s0] sm:$0xff]
    %v30 = vpack.c.bf16 %v29, %v29
    %v31 = vld [vmem:[%s1] sm:$0xf]
    %v32 = vld [vmem:[%s1 + $0x4] sm:$0xf]
    %v33 = vld [vmem:[%s1 + $0x8] sm:$0xf]
    %v34 = vld [vmem:[%s1 + $0xc] sm:$0xf]
    %v35 = vld [vmem:[%s2] sm:$0x1]
    %v37 = vlaneseq
    %v38 = vshrl.u32 %v37, 7
    %v39 = vsub.s32 0, %v38
    %v40 = vrot.slane %v35, %v39
    %v46 = vunpack.c.l.b16 %v31
    %v47 = vunpack.c.l.b16 %v32
    %v48 = vunpack.c.l.b16 %v33
    %v49 = vunpack.c.l.b16 %v34
    %v50 = vpack.c.b16 %v47, %v46
    %v51 = vpack.c.b16 %v49, %v48
    %vm54 = vcmask 261120
    %v56 = vsel %vm54, %v30, 0
    %58 = vmatprep.subr.bf16.mxu0 0
    %59 = vmatpush1.bf16.msra.mxu0 0
    %60 = vmatprep.subr.bf16.mxu0 0
    %61 = vmatpush1.bf16.msra.mxu0 0
    %62 = vmatprep.subr.bf16.mxu0 0
    %63 = vmatpush1.bf16.msra.mxu0 0
    %64 = vmatprep.subr.bf16.mxu0 0
    %65 = vmatpush1.bf16.msra.mxu0 0
    %66 = vmatprep.subr.bf16.mxu0 0
    %67 = vmatpush1.bf16.msra.mxu0 0
    %68 = vmatprep.subr.bf16.mxu0 0
    %69 = vmatpush1.bf16.msra.mxu0 0
    %70 = vmatprep.subr.bf16.mxu0 0
    %71 = vmatpush1.bf16.msra.mxu0 %v51
    %72 = vmatprep.subr.bf16.mxu0 0
    %73 = vmatpush1.bf16.msra.mxu0 %v50
    %74 = vmatprep.subr.bf16.mxu0 0
    %75 = vmatpush2.bf16.msra.mxu0 0
    %76 = vmatprep.subr.bf16.mxu0 0
    %77 = vmatpush2.bf16.msra.mxu0 0
    %78 = vmatprep.subr.bf16.mxu0 0
    %79 = vmatpush2.bf16.msra.mxu0 0
    %80 = vmatprep.subr.bf16.mxu0 0
    %81 = vmatpush2.bf16.msra.mxu0 0
    %82 = vmatprep.subr.bf16.mxu0 0
    %83 = vmatpush2.bf16.msra.mxu0 0
    %84 = vmatprep.subr.bf16.mxu0 0
    %85 = vmatpush2.bf16.msra.mxu0 0
    %86 = vmatprep.subr.bf16.mxu0 0
    %87 = vmatpush2.bf16.msra.mxu0 0
    %88 = vmatprep.subr.bf16.mxu0 0
    %89 = vmatpush2.bf16.msra.mxu0 0
    %90 = vmatprep.mubr.bf16.mxu0 0
    %91 = vmatmul.mubr.bf16.gmra.mxu0 %v56
    %v92 = vpop.f32.mrf.mxu0
    %v93 = vadd.f32 %v40, %v92
    %v94 = vpop.f32.mrf.mxu0
    %v95 = vpop.f32.mrf.mxu0
    %v96 = vpop.f32.mrf.mxu0
    %97 = vdwg.mxu0
    %v98 = vmax.f32 %v93, 0.0
    %v99 = vpack.c.bf16 %v98, %v98
    %v100 = vld [vmem:[%s3] sm:$0xf]
    %v101 = vld [vmem:[%s3 + $0x4] sm:$0xf]
    %v102 = vld [vmem:[%s3 + $0x8] sm:$0xf]
    %v103 = vld [vmem:[%s3 + $0xc] sm:$0xf]
    %v104 = vld [vmem:[%s3 + $0x10] sm:$0xf]
    %v105 = vld [vmem:[%s3 + $0x14] sm:$0xf]
    %v106 = vld [vmem:[%s3 + $0x18] sm:$0xf]
    %v107 = vld [vmem:[%s3 + $0x1c] sm:$0xf]
    %v108 = vld [vmem:[%s4] sm:$0x1]
    %v110 = vlaneseq
    %v111 = vshrl.u32 %v110, 7
    %v112 = vsub.s32 0, %v111
    %v113 = vrot.slane %v108, %v112
    %v123 = vunpack.c.l.b16 %v100
    %v124 = vunpack.c.l.b16 %v101
    %v125 = vunpack.c.l.b16 %v102
    %v126 = vunpack.c.l.b16 %v103
    %v127 = vunpack.c.l.b16 %v104
    %v128 = vunpack.c.l.b16 %v105
    %v129 = vunpack.c.l.b16 %v106
    %v130 = vunpack.c.l.b16 %v107
    %v131 = vpack.c.b16 %v124, %v123
    %v132 = vpack.c.b16 %v126, %v125
    %v133 = vpack.c.b16 %v128, %v127
    %v134 = vpack.c.b16 %v130, %v129
    %vm139 = vcmask 523264
    %v141 = vsel %vm139, %v99, 0
    %143 = vmatprep.subr.bf16.mxu0 0
    %144 = vmatpush1.bf16.msra.mxu0 0
    %145 = vmatprep.subr.bf16.mxu0 0
    %146 = vmatpush1.bf16.msra.mxu0 0
    %147 = vmatprep.subr.bf16.mxu0 0
    %148 = vmatpush1.bf16.msra.mxu0 0
    %149 = vmatprep.subr.bf16.mxu0 0
    %150 = vmatpush1.bf16.msra.mxu0 0
    %151 = vmatprep.subr.bf16.mxu0 0
    %152 = vmatpush1.bf16.msra.mxu0 %v134
    %153 = vmatprep.subr.bf16.mxu0 0
    %154 = vmatpush1.bf16.msra.mxu0 %v133
    %155 = vmatprep.subr.bf16.mxu0 0
    %156 = vmatpush1.bf16.msra.mxu0 %v132
    %157 = vmatprep.subr.bf16.mxu0 0
    %158 = vmatpush1.bf16.msra.mxu0 %v131
    %159 = vmatprep.subr.bf16.mxu0 0
    %160 = vmatpush2.bf16.msra.mxu0 0
    %161 = vmatprep.subr.bf16.mxu0 0
    %162 = vmatpush2.bf16.msra.mxu0 0
    %163 = vmatprep.subr.bf16.mxu0 0
    %164 = vmatpush2.bf16.msra.mxu0 0
    %165 = vmatprep.subr.bf16.mxu0 0
    %166 = vmatpush2.bf16.msra.mxu0 0
    %167 = vmatprep.subr.bf16.mxu0 0
    %168 = vmatpush2.bf16.msra.mxu0 0
    %169 = vmatprep.subr.bf16.mxu0 0
    %170 = vmatpush2.bf16.msra.mxu0 0
    %171 = vmatprep.subr.bf16.mxu0 0
    %172 = vmatpush2.bf16.msra.mxu0 0
    %173 = vmatprep.subr.bf16.mxu0 0
    %174 = vmatpush2.bf16.msra.mxu0 0
    %175 = vmatprep.mubr.bf16.mxu0 0
    %176 = vmatmul.mubr.bf16.gmra.mxu0 %v141
    %v177 = vpop.f32.mrf.mxu0
    %v178 = vadd.f32 %v113, %v177
    %v179 = vpop.f32.mrf.mxu0
    %v180 = vpop.f32.mrf.mxu0
    %v181 = vpop.f32.mrf.mxu0
    %182 = vdwg.mxu0
    %v183 = vmax.f32 %v178, 0.0
    %v184 = vld [vmem:[%s5] sm:$0x1]
    %v186 = vlaneseq
    %v187 = vshrl.u32 %v186, 7
    %v188 = vsub.s32 0, %v187
    %v189 = vrot.slane %v184, %v188
    %v191 = vmul.f32 %v183, %v189
    %vm192 = vcmask 64512
    %v193 = vsel %vm192, %v191, 0.0
    %194 = vadd.xlane.f32.xlu0 %v193
    %v195 = vpop.xlane.xlu0 %194
    %s196 = sld [smem:[#allocation2]]
    %v197 = vstv %s196
    %v198 = vadd.f32 %v195, %v197
    %v200 = vlaneseq
    %v201 = vand.u32 %v200, 127
    %v202 = vlaneseq
    %v203 = vshrl.u32 %v202, 7
    %v204 = vsub.s32 %v201, %v203
    %v205 = vrot.slane %v198, %v204
    %vm207 = vcmask 57344
    %208 = vst.msk [vmem:[#allocation3] sm:$0x1] %vm207, %v205
    // Predicated region
    $region30: #{nn2net_forward.1} parent=1 // pred_check
      _
    $region31: #{nn2net_forward.1} parent=1 // pred_check_branch
      %210 = sbr.rel (0) target = $region33
    $region32: #{nn2net_forward.1} parent=1 // pred_region
      %s212 = ssub.s32 16, 16
      %213 = vsyncadd [#allocation4], %s212
      %s215 = sshll.u32 [#allocation3], 4
      %s216 = int_to_ptr.vmem [resolvable:$true] %s215
      %218 = dma.vmem_to_hbm [thread:$0]  %s216, 16, %s7, [#allocation4]
    $region33: #{nn2net_forward.1} parent=1 // pred_fallthru
      _
    // Predicated region
    $region34: #{nn2net_forward.1} parent=1 // pred_check
      _
    $region35: #{nn2net_forward.1} parent=1 // pred_check_branch
      %220 = sbr.rel (0) target = $region37
    $region36: #{nn2net_forward.1} parent=1 // pred_region
      %221 = dma.done [#allocation4], 16
    $region37: #{nn2net_forward.1} parent=1 // pred_fallthru
      _
    %222 = vsyncpa [#allocation4], 1

</llo_original>
